<compile_context>
chip_gen: v7x
topology: tpu7x:2x2x1
jax: 0.10.0
libtpu: 0.0.40
codegen_flags: <defaults>
</compile_context>

<pallas_src>
import jax
import jax.numpy as jnp
from jax.experimental import pallas as pl
from jax.experimental.pallas import tpu as pltpu

LANE = 128


def _swiglu_kernel(x_ref, gate_ref, o_ref):
    # SiLU(x) * gate; compute in f32 for accuracy, cast back to output dtype.
    xf = x_ref[...].astype(jnp.float32)
    gf = gate_ref[...].astype(jnp.float32)
    silu = xf * jax.nn.sigmoid(xf)
    o_ref[...] = (silu * gf).astype(o_ref.dtype)


def _largest_lane_width(n, cap):
    """Largest multiple of 128 that divides n, capped at `cap`."""
    best = LANE
    w = LANE
    while w <= cap:
        if n % w == 0:
            best = w
        w += LANE
    return best


def swiglu(x, gate, *, max_tile_bytes=4 * 1024 * 1024, lane_cap=4096):
    assert x.shape == gate.shape, "x and gate must have the same shape"
    orig_shape = x.shape
    out_dtype = x.dtype
    n = x.size
    itemsize = jnp.dtype(out_dtype).itemsize

    # Sublane alignment requirement depends on element width (packing).
    sub = 8 if itemsize >= 4 else (16 if itemsize == 2 else 32)

    # --- Layout: lane-dense 2-D slab (rows, W). Common path: W divides n, so
    # there is no wrapper-side pad or final slice (both would be extra
    # full-tensor HBM copies for a purely bandwidth-bound op).
    pad = 0
    if n % LANE == 0:
        n_eff = n
        xf = x.reshape(-1)
        gf = gate.reshape(-1)
    else:
        # Rare fallback: element count not a multiple of 128 -> minimal pad.
        n_eff = ((n + LANE - 1) // LANE) * LANE
        pad = n_eff - n
        xf = jnp.pad(x.reshape(-1), (0, pad))
        gf = jnp.pad(gate.reshape(-1), (0, pad))

    W = _largest_lane_width(n_eff, lane_cap)
    rows = n_eff // W
    x2 = xf.reshape(rows, W)
    g2 = gf.reshape(rows, W)

    # --- Block sizing: ~max_tile_bytes per input block (v7x-VMEM safe with
    # 3 arrays double-buffered), sublane-aligned, and >= 2 grid steps when the
    # problem is large enough so v7x's two TensorCores both get work.
    br = max(1, max_tile_bytes // (W * itemsize))
    if br >= rows:
        block_rows = rows
    else:
        block_rows = max(sub, (br // sub) * sub)
    if block_rows >= rows and rows >= 2 * sub:
        block_rows = max(sub, ((rows // 2) // sub) * sub)

    grid = (pl.cdiv(rows, block_rows),)
    spec = pl.BlockSpec((block_rows, W), lambda i: (i, 0))

    out2 = pl.pallas_call(
        _swiglu_kernel,
        out_shape=jax.ShapeDtypeStruct((rows, W), out_dtype),
        grid_spec=pltpu.PrefetchScalarGridSpec(
            num_scalar_prefetch=0,
            grid=grid,
            in_specs=[spec, spec],
            out_specs=pl.BlockSpec((block_rows, W), lambda i: (i, 0)),
        ),
        compiler_params=pltpu.CompilerParams(
            dimension_semantics=("parallel",),
        ),
        cost_estimate=pl.CostEstimate(
            flops=4 * n,
            transcendentals=n,
            bytes_accessed=3 * n * itemsize,
        ),
    )(x2, g2)

    if pad:
        return out2.reshape(-1)[:n].reshape(orig_shape)
    return out2.reshape(orig_shape)


if __name__ == "__main__":
    key = jax.random.PRNGKey(0)
    kx, kg = jax.random.split(key)

    # Shapes consistent with an NCHW activation tensor (matches the spec).
    x = jax.random.normal(kx, (2, 4, 16, 16), dtype=jnp.float32)
    gate = jax.random.normal(kg, (2, 4, 16, 16), dtype=jnp.float32)

    out = swiglu(x, gate)
    jax.block_until_ready(out)

    ref = jax.nn.silu(x) * gate
    assert out.shape == x.shape and out.dtype == x.dtype
    assert jnp.allclose(out, ref, atol=1e-5, rtol=1e-5), "mismatch vs reference"

    # Second (slightly larger, still small) shape exercising a wide lane slab
    # and a multi-step grid.
    kx2, kg2 = jax.random.split(kg)
    x2 = jax.random.normal(kx2, (8, 32, 32, 32), dtype=jnp.float32)
    g2 = jax.random.normal(kg2, (8, 32, 32, 32), dtype=jnp.float32)
    out2 = swiglu(x2, g2)
    jax.block_until_ready(out2)
    ref2 = jax.nn.silu(x2) * g2
    assert jnp.allclose(out2, ref2, atol=1e-5, rtol=1e-5), "mismatch vs reference (large)"

    print("KERNEL_OK")
</pallas_src>

<mosaic_0001>
module attributes {stable_mosaic.version = 11 : i64} {
  func.func @_swiglu_kernel(%arg0: i32, %arg1: memref<1x2048xf32, #tpu.memory_space<vmem>>, %arg2: memref<1x2048xf32, #tpu.memory_space<vmem>>, %arg3: memref<1x2048xf32, #tpu.memory_space<vmem>>) attributes {dimension_semantics = [#tpu.dimension_semantics<parallel>], iteration_bounds = array<i64: 1>, scalar_prefetch = 0 : i64, scratch_operands = 0 : i64, tpu.core_type = #tpu.core_type<tc>, window_params = [{transform_indices = @transform_0, window_bounds = array<i64: 1, 2048>}, {transform_indices = @transform_1, window_bounds = array<i64: 1, 2048>}, {transform_indices = @transform_2, window_bounds = array<i64: 1, 2048>}]} {
    %c0 = arith.constant 0 : index
    %c0_0 = arith.constant 0 : index
    %0 = vector.load %arg1[%c0, %c0_0] : memref<1x2048xf32, #tpu.memory_space<vmem>>, vector<1x2048xf32>
    %c0_1 = arith.constant 0 : index
    %c0_2 = arith.constant 0 : index
    %1 = vector.load %arg2[%c0_1, %c0_2] : memref<1x2048xf32, #tpu.memory_space<vmem>>, vector<1x2048xf32>
    %2 = arith.negf %0 : vector<1x2048xf32>
    %3 = math.exp %2 : vector<1x2048xf32>
    %cst = arith.constant 1.000000e+00 : f32
    %4 = vector.broadcast %cst : f32 to vector<1x2048xf32>
    %5 = arith.addf %4, %3 : vector<1x2048xf32>
    %6 = arith.divf %4, %5 : vector<1x2048xf32>
    %7 = arith.mulf %0, %6 : vector<1x2048xf32>
    %8 = arith.mulf %7, %1 : vector<1x2048xf32>
    %c0_3 = arith.constant 0 : index
    %c0_4 = arith.constant 0 : index
    %9 = vector.load %arg3[%c0_3, %c0_4] : memref<1x2048xf32, #tpu.memory_space<vmem>>, vector<1x2048xf32>
    tpu.vector_store %arg3[%c0_3, %c0_4], %8 {strides = array<i32>} : memref<1x2048xf32, #tpu.memory_space<vmem>>, vector<1x2048xf32>,
    return
  }
  func.func @transform_0(%arg0: i32) -> (i32, i32) {
    %c0_i32 = arith.constant 0 : i32
    %c0_i32_0 = arith.constant 0 : i32
    return %arg0, %c0_i32 : i32, i32
  }
  func.func @transform_1(%arg0: i32) -> (i32, i32) {
    %c0_i32 = arith.constant 0 : i32
    %c0_i32_0 = arith.constant 0 : i32
    return %arg0, %c0_i32 : i32, i32
  }
  func.func @transform_2(%arg0: i32) -> (i32, i32) {
    %c0_i32 = arith.constant 0 : i32
    %c0_i32_0 = arith.constant 0 : i32
    return %arg0, %c0_i32 : i32, i32
  }
}

</mosaic_0001>

<llo_original>
// kernel: tpu_custom_call.1
$region0: #{tpu_custom_call.1}
  #allocation0 [shape = 'u32[]', space=smem, size = 0x4, offset = 0x4, fixed_abs, tag = 'smem constant byte address 0x4 - core index']
  #allocation1 [shape = 'u32[144,128]{1,0:T(1,128)}', space=vmem, size = 0x12000, scoped, tag = 'internal scratch']
  %s0 = inlined_call_operand.hbm [shape: f32[1,2048], index: 0, kind: input, shape index: {}]
  %s1 = inlined_call_operand.hbm [shape: f32[1,2048], index: 1, kind: input, shape index: {}]
  %s2 = inlined_call_operand.hbm [shape: f32[1,2048], index: 2, kind: output, shape index: {}]
  %s3 = sld [smem:[#allocation0]]
  $region26: #{tpu_custom_call.1} parent=0
    _
  %s5 = ssub.s32 1, %s3
  %s6 = scalar_select 0, %s5, %s3
  $region1: #{tpu_custom_call.1} parent=0
    #allocation2 [shape = 'u8[8192]{0}', space=vmem, size = 0x2000, scoped, tag = 'input window, operand 0, single buffered']
    #allocation3 [shape = 's32[1]{0}', space=sflag, size = 0x4, scoped, tag = 'scoped memory for tpu_custom_call.1']
    #allocation4 [shape = 's32[1]{0}', space=sflag, size = 0x4, scoped, tag = 'scoped memory for tpu_custom_call.1']
    #allocation5 [shape = 'u8[8192]{0}', space=vmem, size = 0x2000, scoped, tag = 'input window, operand 1, single buffered']
    #allocation6 [shape = 's32[1]{0}', space=sflag, size = 0x4, scoped, tag = 'scoped memory for tpu_custom_call.1']
    #allocation7 [shape = 'u8[8192]{0}', space=vmem, size = 0x2000, scoped, tag = 'output window, operand 0, single buffered']
    %7 = vsyncpa [#allocation3], 0
    %8 = vsyncpa [#allocation6], 0
    %9 = vsyncpa [#allocation4], 0
    // Predicated region
    $region2: #{tpu_custom_call.1} parent=1 // pred_check
      _
    $region3: #{tpu_custom_call.1} parent=1 // pred_check_branch
      %11 = sbr.rel (0) target = $region5
    $region4: #{tpu_custom_call.1} parent=1 // pred_region
      %s13 = ssub.s32 256, 256
      %14 = vsyncadd [#allocation3], %s13
      %s16 = sshll.u32 [#allocation2], 4
      %s17 = int_to_ptr.vmem [resolvable:$true] %s16
      %19 = dma.hbm_to_vmem [thread:$0]  %s0, 256, %s17, [#allocation3]
    $region5: #{tpu_custom_call.1} parent=1 // pred_fallthru
      _
    // Predicated region
    $region6: #{tpu_custom_call.1} parent=1 // pred_check
      _
    $region7: #{tpu_custom_call.1} parent=1 // pred_check_branch
      %21 = sbr.rel (0) target = $region9
    $region8: #{tpu_custom_call.1} parent=1 // pred_region
      %s23 = ssub.s32 256, 256
      %24 = vsyncadd [#allocation6], %s23
      %s26 = sshll.u32 [#allocation5], 4
      %s27 = int_to_ptr.vmem [resolvable:$true] %s26
      %29 = dma.hbm_to_vmem [thread:$0]  %s1, 256, %s27, [#allocation6]
    $region9: #{tpu_custom_call.1} parent=1 // pred_fallthru
      _
    // Predicated region
    $region10: #{tpu_custom_call.1} parent=1 // pred_check
      _
    $region11: #{tpu_custom_call.1} parent=1 // pred_check_branch
      %31 = sbr.rel (0) target = $region13
    $region12: #{tpu_custom_call.1} parent=1 // pred_region
      %32 = dma.done [#allocation3], 256
    $region13: #{tpu_custom_call.1} parent=1 // pred_fallthru
      _
    // Predicated region
    $region14: #{tpu_custom_call.1} parent=1 // pred_check
      _
    $region15: #{tpu_custom_call.1} parent=1 // pred_check_branch
      %34 = sbr.rel (0) target = $region17
    $region16: #{tpu_custom_call.1} parent=1 // pred_region
      %35 = dma.done [#allocation6], 256
    $region17: #{tpu_custom_call.1} parent=1 // pred_fallthru
      _
    %v36 = vld [vmem:[#allocation2] sm:$0xff]
    %v37 = vld [vmem:[#allocation2 + $0x8] sm:$0xff]
    %v38 = vld [vmem:[#allocation5] sm:$0xff]
    %v39 = vld [vmem:[#allocation5 + $0x8] sm:$0xff]
    %v40 = vxor.u32 %v36, 2147483648
    %v41 = vxor.u32 %v37, 2147483648
    %v42 = vmul.f32 %v40, 1.442695
    %v43 = vpow.pop %v42
    %v44 = vmul.f32 %v41, 1.442695
    %v45 = vpow.pop %v44
    %v46 = vadd.f32 %v43, 1.0
    %v47 = vadd.f32 %v45, 1.0
    %v48 = vrcp.pop %v46
    %v49 = vmul.f32 1.0, %v48
    %v50 = vrcp.pop %v47
    %v51 = vmul.f32 1.0, %v50
    %v52 = vmul.f32 %v36, %v49
    %v53 = vmul.f32 %v37, %v51
    %v54 = vmul.f32 %v52, %v38
    %v55 = vmul.f32 %v53, %v39
    %56 = vst [vmem:[#allocation7] sm:$0xff] %v54
    %57 = vst [vmem:[#allocation7 + $0x8] sm:$0xff] %v55
    // Predicated region
    $region18: #{tpu_custom_call.1} parent=1 // pred_check
      _
    $region19: #{tpu_custom_call.1} parent=1 // pred_check_branch
      %59 = sbr.rel (0) target = $region21
    $region20: #{tpu_custom_call.1} parent=1 // pred_region
      %s61 = ssub.s32 256, 256
      %62 = vsyncadd [#allocation4], %s61
      %s64 = sshll.u32 [#allocation7], 4
      %s65 = int_to_ptr.vmem [resolvable:$true] %s64
      %67 = dma.vmem_to_hbm [thread:$0]  %s65, 256, %s2, [#allocation4]
    $region21: #{tpu_custom_call.1} parent=1 // pred_fallthru
      _
    // Predicated region
    $region22: #{tpu_custom_call.1} parent=1 // pred_check
      _
    $region23: #{tpu_custom_call.1} parent=1 // pred_check_branch
      %69 = sbr.rel (0) target = $region25
    $region24: #{tpu_custom_call.1} parent=1 // pred_region
      %70 = dma.done [#allocation4], 256
    $region25: #{tpu_custom_call.1} parent=1 // pred_fallthru
      _
    %71 = vsyncpa [#allocation3], 1
    %72 = vsyncpa [#allocation6], 1
    %73 = vsyncpa [#allocation4], 1

</llo_original>
